<compile_context>
chip_gen: v7x
topology: tpu7x:2x2x1
jax: 0.10.0
libtpu: 0.0.40
codegen_flags: <defaults>
</compile_context>

<pallas_src>
import functools

import jax
import jax.numpy as jnp
from jax.experimental import pallas as pl
from jax.experimental.pallas import tpu as pltpu


def _pairnorm_kernel(x_ref, o_ref, *, scale, eps):
    # x_ref block: (TN, D). Whole feature axis is resident -> both row-wise
    # reductions (mean, L2 norm) are done here. Stream in the input dtype,
    # upcast to fp32 only for the reductions / normalization math.
    x = x_ref[...].astype(jnp.float32)
    mean = jnp.mean(x, axis=1, keepdims=True)                 # [TN, 1]
    xc = x - mean                                             # centered rows
    std = jnp.sqrt(jnp.sum(xc * xc, axis=1, keepdims=True))   # [TN, 1] L2 norm
    # Fold `scale` into the per-row scalar and use the EUP reciprocal instead of
    # a full-tile VPU divide. approx=False keeps numerics tight (the reciprocal
    # is only a [TN, 1] column, so the extra precision is essentially free).
    inv = scale * pl.reciprocal(std + eps, approx=False)      # [TN, 1]
    o_ref[...] = (xc * inv).astype(o_ref.dtype)


def _choose_block_rows(N, D, dtype, vmem_budget_bytes):
    """Pick a row-tile size from a VMEM working-set budget.

    Working set per grid step ~= double-buffered input + output blocks in the
    streamed dtype plus ~2 full-tile fp32 temporaries inside the kernel body.
    The budget (default 16 MiB) is deliberately conservative so the same tile
    choice is legal on v5e (16 MiB scoped default, raised below), v6e and
    v7x (64 MiB physical VMEM per TensorCore).
    """
    itemsize = jnp.dtype(dtype).itemsize
    sub = 16 if itemsize == 2 else 8          # sublane packing multiple
    if N <= sub:
        return N                              # single block == full row extent
    bytes_per_row = D * (4 * itemsize + 2 * 4)
    budget_rows = max(sub, vmem_budget_bytes // bytes_per_row)
    budget_rows = (budget_rows // sub) * sub
    # Keep the grid at >= 2 steps so the "parallel" row axis can be sharded
    # across v7x's two TensorCores (and stays pipelined on v5e/v6e).
    two_step_rows = ((pl.cdiv(N, 2) + sub - 1) // sub) * sub
    return max(sub, min(budget_rows, two_step_rows))


def pairnorm(x, scale=1.0, eps=1e-6, block_rows=None,
             vmem_budget_bytes=16 * 1024 * 1024):
    """PairNorm forward. x: [N, D]."""
    N, D = x.shape
    itemsize = jnp.dtype(x.dtype).itemsize
    sub = 16 if itemsize == 2 else 8

    if block_rows is None:
        block_rows = _choose_block_rows(N, D, x.dtype, vmem_budget_bytes)
    else:
        block_rows = min(int(block_rows), N)
        if block_rows != N:
            # block_shape rows must be a multiple of the sublane packing
            # (8 for fp32, 16 for bf16) unless it equals the full extent.
            block_rows = max(sub, ((block_rows + sub - 1) // sub) * sub)
            block_rows = min(block_rows, N) if block_rows >= N else block_rows
    block_rows = min(block_rows, N)

    grid = (pl.cdiv(N, block_rows),)   # ragged last block is masked by Pallas

    # NOTE: D < 128 (as in the demo) leaves lanes masked on load/store; for
    # production shapes prefer D a multiple of 128 (pad features in the caller)
    # to get lane-dense, unmasked vst.

    kernel = functools.partial(_pairnorm_kernel, scale=float(scale), eps=float(eps))
    return pl.pallas_call(
        kernel,
        out_shape=jax.ShapeDtypeStruct((N, D), x.dtype),
        grid_spec=pltpu.PrefetchScalarGridSpec(
            num_scalar_prefetch=0,
            grid=grid,
            in_specs=[pl.BlockSpec((block_rows, D), lambda i: (i, 0))],
            out_specs=pl.BlockSpec((block_rows, D), lambda i: (i, 0)),
        ),
        compiler_params=pltpu.CompilerParams(
            dimension_semantics=("parallel",),
            # Raise v5e's 16 MiB scoped default; stays well under v7x's
            # 64 MiB physical VMEM per TensorCore.
            vmem_limit_bytes=32 * 1024 * 1024,
        ),
    )(x)


def _pairnorm_ref(x, scale=1.0, eps=1e-6):
    x = x.astype(jnp.float32)
    mean = jnp.mean(x, axis=1, keepdims=True)
    xc = x - mean
    std = jnp.sqrt(jnp.sum(xc * xc, axis=1, keepdims=True))
    return scale * xc / (std + eps)


if __name__ == "__main__":
    # PairNorm has no learnable parameters (scale/eps are plain hyperparams).
    key = jax.random.PRNGKey(0)
    N, D = 16, 32  # nodes x hidden features (small demo shape)
    x = jax.random.normal(key, (N, D), dtype=jnp.float32)

    out = pairnorm(x, scale=1.0, eps=1e-6)
    out = jax.block_until_ready(out)

    ref = _pairnorm_ref(x, scale=1.0, eps=1e-6)
    assert out.shape == (N, D)
    assert jnp.allclose(out, ref.astype(out.dtype), atol=1e-5, rtol=1e-5), \
        "mismatch vs reference"

    print("KERNEL_OK")
</pallas_src>

<mosaic_0001>
module attributes {stable_mosaic.version = 11 : i64} {
  func.func @_pairnorm_kernel(%arg0: i32, %arg1: memref<8x32xf32, #tpu.memory_space<vmem>>, %arg2: memref<8x32xf32, #tpu.memory_space<vmem>>) attributes {dimension_semantics = [#tpu.dimension_semantics<parallel>], iteration_bounds = array<i64: 2>, scalar_prefetch = 0 : i64, scratch_operands = 0 : i64, tpu.core_type = #tpu.core_type<tc>, window_params = [{transform_indices = @transform_0, window_bounds = array<i64: 8, 32>}, {transform_indices = @transform_1, window_bounds = array<i64: 8, 32>}]} {
    %c0 = arith.constant 0 : index
    %c0_0 = arith.constant 0 : index
    %0 = vector.load %arg1[%c0, %c0_0] : memref<8x32xf32, #tpu.memory_space<vmem>>, vector<8x32xf32>
    %cst = arith.constant dense<0.000000e+00> : vector<8xf32>
    %1 = vector.multi_reduction <add>, %0, %cst [1] : vector<8x32xf32> to vector<8xf32>
    %2 = vector.shape_cast %1 : vector<8xf32> to vector<8x1xf32>
    %cst_1 = arith.constant 3.200000e+01 : f32
    %3 = vector.broadcast %cst_1 : f32 to vector<8x1xf32>
    %4 = arith.divf %2, %3 : vector<8x1xf32>
    %5 = vector.broadcast %4 : vector<8x1xf32> to vector<8x32xf32>
    %6 = arith.subf %0, %5 : vector<8x32xf32>
    %7 = arith.mulf %6, %6 : vector<8x32xf32>
    %cst_2 = arith.constant dense<0.000000e+00> : vector<8xf32>
    %8 = vector.multi_reduction <add>, %7, %cst_2 [1] : vector<8x32xf32> to vector<8xf32>
    %9 = vector.shape_cast %8 : vector<8xf32> to vector<8x1xf32>
    %10 = math.sqrt %9 : vector<8x1xf32>
    %cst_3 = arith.constant 9.99999997E-7 : f32
    %11 = vector.broadcast %cst_3 : f32 to vector<8x1xf32>
    %12 = arith.addf %10, %11 : vector<8x1xf32>
    %13 = tpu.reciprocal %12 : vector<8x1xf32> -> vector<8x1xf32>
    %cst_4 = arith.constant 1.000000e+00 : f32
    %14 = vector.broadcast %cst_4 : f32 to vector<8x1xf32>
    %15 = arith.mulf %14, %13 : vector<8x1xf32>
    %16 = vector.broadcast %15 : vector<8x1xf32> to vector<8x32xf32>
    %17 = arith.mulf %6, %16 : vector<8x32xf32>
    %c0_5 = arith.constant 0 : index
    %c0_6 = arith.constant 0 : index
    %18 = vector.load %arg2[%c0_5, %c0_6] : memref<8x32xf32, #tpu.memory_space<vmem>>, vector<8x32xf32>
    tpu.vector_store %arg2[%c0_5, %c0_6], %17 {strides = array<i32>} : memref<8x32xf32, #tpu.memory_space<vmem>>, vector<8x32xf32>,
    return
  }
  func.func @transform_0(%arg0: i32) -> (i32, i32) {
    %c0_i32 = arith.constant 0 : i32
    %c0_i32_0 = arith.constant 0 : i32
    return %arg0, %c0_i32 : i32, i32
  }
  func.func @transform_1(%arg0: i32) -> (i32, i32) {
    %c0_i32 = arith.constant 0 : i32
    %c0_i32_0 = arith.constant 0 : i32
    return %arg0, %c0_i32 : i32, i32
  }
}

</mosaic_0001>

<llo_original>
// kernel: tpu_custom_call.1
$region0: #{tpu_custom_call.1}
  #allocation0 [shape = 'u32[]', space=smem, size = 0x4, offset = 0x4, fixed_abs, tag = 'smem constant byte address 0x4 - core index']
  #allocation1 [shape = 'u32[144,128]{1,0:T(1,128)}', space=vmem, size = 0x12000, scoped, tag = 'internal scratch']
  %s0 = inlined_call_operand.hbm [shape: f32[16,32], index: 0, kind: input, shape index: {}]
  %s1 = inlined_call_operand.hbm [shape: f32[16,32], index: 1, kind: output, shape index: {}]
  %s2 = sld [smem:[#allocation0]]
  $region41: #{tpu_custom_call.1} parent=0
    _
  %s4 = ssub.s32 1, %s2
  %s5 = scalar_select 0, %s4, %s2
  $region1: #{tpu_custom_call.1} parent=0
    #allocation2 [shape = 'u8[8192]{0}', space=vmem, size = 0x2000, scoped, tag = 'input window, operand 0']
    #allocation3 [shape = 's32[2]{0}', space=sflag, size = 0x8, scoped, tag = 'scoped memory for tpu_custom_call.1']
    #allocation4 [shape = 's32[2]{0}', space=sflag, size = 0x8, scoped, tag = 'scoped memory for tpu_custom_call.1']
    #allocation5 [shape = 'u8[8192]{0}', space=vmem, size = 0x2000, scoped, tag = 'output window, operand 0']
    %6 = vsyncpa [#allocation3], 0
    %s7 = scalar_lea.sflag [#allocation3], 1
    %8 = vsyncpa %s7, 0
    %9 = vsyncpa [#allocation4], 0
    %s10 = scalar_lea.sflag [#allocation4], 1
    %11 = vsyncpa %s10, 0
    loop: start=0, step=1, limit=4
    $region2: #{tpu_custom_call.1} parent=1 // loop_pre_header
      _
    $region3: #{tpu_custom_call.1} parent=1 // loop_header
      %s13 = sphi 0, %s17
      %p14 = scmp.ge.s32.totalorder %s13, 4
      %s23 = sphi 0, %s25
      %s26 = sphi 0, %s23
      %s27 = sphi 0, %s26
      %s43 = sphi 0, %s27
      %s49 = sphi 0, %s51
      %s52 = sphi 0, %s49
      %s53 = sphi 0, %s52
      %s69 = sphi 0, %s53
    $region4: #{tpu_custom_call.1} parent=1 // loop_header_branch
      %16 = sbr.rel (%p14) target = $region8
    $region5: #{tpu_custom_call.1} parent=1 // loop_body
      %s18 = ssub.s32 %s13, 1
      %s19 = ssub.s32 %s13, 2
      %s20 = sadd.s32 %s13, 1
      %s21 = ssub.s32 %s13, %s20
      %p22 = scmp.eq.s32.totalorder %s21, 0
      %s24 = sadd.s32 %s23, 1
      %s25 = scalar_select %p22, %s23, %s24
      %p28 = pneg %p22
      %p29 = scmp.eq.s32.totalorder %s13, 1
      %p30 = por %p28, %p29
      %p31 = scmp.ne.s32.totalorder %s23, %s26
      %p32 = scmp.eq.s32.totalorder %s13, 0
      %p33 = por %p31, %p32
      %p34 = scmp.ne.s32.totalorder %s23, %s26
      %p35 = scmp.eq.s32.totalorder %s18, 1
      %p36 = por %p34, %p35
      %p37 = scmp.ne.s32.totalorder %s26, %s27
      %p38 = scmp.eq.s32.totalorder %s18, 0
      %p39 = por %p37, %p38
      %p40 = scmp.ne.s32.totalorder %s26, %s27
      %p41 = scmp.eq.s32.totalorder %s19, 1
      %p42 = por %p40, %p41
      %p44 = scmp.ne.s32.totalorder %s27, %s43
      %p45 = scmp.eq.s32.totalorder %s19, 0
      %p46 = por %p44, %p45
      %s47 = ssub.s32 %s13, %s20
      %p48 = scmp.eq.s32.totalorder %s47, 0
      %s50 = sadd.s32 %s49, 1
      %s51 = scalar_select %p48, %s49, %s50
      %p54 = pneg %p48
      %p55 = scmp.eq.s32.totalorder %s13, 1
      %p56 = por %p54, %p55
      %p57 = scmp.ne.s32.totalorder %s49, %s52
      %p58 = scmp.eq.s32.totalorder %s13, 0
      %p59 = por %p57, %p58
      %p60 = scmp.ne.s32.totalorder %s49, %s52
      %p61 = scmp.eq.s32.totalorder %s18, 1
      %p62 = por %p60, %p61
      %p63 = scmp.ne.s32.totalorder %s52, %s53
      %p64 = scmp.eq.s32.totalorder %s18, 0
      %p65 = por %p63, %p64
      %p66 = scmp.ne.s32.totalorder %s52, %s53
      %p67 = scmp.eq.s32.totalorder %s19, 1
      %p68 = por %p66, %p67
      %p70 = scmp.ne.s32.totalorder %s53, %s69
      %p71 = scmp.eq.s32.totalorder %s19, 0
      %p72 = por %p70, %p71
      %p73 = scmp.le.s32.totalorder 1, %s13
      %p74 = scmp.lt.s32.totalorder %s13, 3
      %p75 = pnand %p73, %p74
      %p76 = pneg %p75
      // Predicated region
      $region9: #{tpu_custom_call.1} parent=5 // pred_check
        _
      $region10: #{tpu_custom_call.1} parent=5 // pred_check_branch
        %78 = sbr.rel (%p75) target = $region12
      $region11: #{tpu_custom_call.1} parent=5 // pred_region
        %s79 = ssub.s32 %s13, 1
      $region12: #{tpu_custom_call.1} parent=5 // pred_fallthru
        _
      %p80 = scmp.lt.s32.totalorder %s13, 2
      // Predicated region
      $region13: #{tpu_custom_call.1} parent=5 // pred_check
        %p81 = pneg %p80
      $region14: #{tpu_custom_call.1} parent=5 // pred_check_branch
        %83 = sbr.rel (%p81) target = $region16
      $region15: #{tpu_custom_call.1} parent=5 // pred_region
        // Predicated region
        $region17: #{tpu_custom_call.1} parent=15 // pred_check
          %p84 = pneg %p33
        $region18: #{tpu_custom_call.1} parent=15 // pred_check_branch
          %86 = sbr.rel (%p84) target = $region20
        $region19: #{tpu_custom_call.1} parent=15 // pred_region
          %s87 = sand.u32 %s23, 1
          %s88 = scalar_lea.sflag [#allocation3], %s87
          %s89 = sand.u32 %s23, 1
          %s90 = smul.addr %s89, 8
          %s91 = scalar_lea.vmem [#allocation2], %s90
          %s93 = ssub.s32 128, 128
          %94 = vsyncadd %s88, %s93
          %s95 = smul.addr %s13, 128
          %s96 = scalar_lea.hbm %s0, %s95
          %s98 = sshll.u32 %s91, 4
          %s99 = int_to_ptr.vmem [resolvable:$true] %s98
          %101 = dma.hbm_to_vmem [thread:$0]  %s96, 128, %s99, %s88
        $region20: #{tpu_custom_call.1} parent=15 // pred_fallthru
          _
      $region16: #{tpu_custom_call.1} parent=5 // pred_fallthru
        _
      %p102 = scmp.le.s32.totalorder 1, %s13
      %p103 = scmp.lt.s32.totalorder %s13, 3
      %p104 = pnand %p102, %p103
      %p105 = pneg %p104
      // Predicated region
      $region21: #{tpu_custom_call.1} parent=5 // pred_check
        _
      $region22: #{tpu_custom_call.1} parent=5 // pred_check_branch
        %107 = sbr.rel (%p104) target = $region24
      $region23: #{tpu_custom_call.1} parent=5 // pred_region
        %s108 = ssub.s32 %s13, 1
        %s109 = sand.u32 %s26, 1
        %s110 = scalar_lea.sflag [#allocation3], %s109
        %s111 = sand.u32 %s26, 1
        %s112 = smul.addr %s111, 8
        %s113 = scalar_lea.vmem [#allocation2], %s112
        // Predicated region
        $region25: #{tpu_custom_call.1} parent=23 // pred_check
          %p114 = pneg %p39
        $region26: #{tpu_custom_call.1} parent=23 // pred_check_branch
          %116 = sbr.rel (%p114) target = $region28
        $region27: #{tpu_custom_call.1} parent=23 // pred_region
          %117 = dma.done %s110, 128
        $region28: #{tpu_custom_call.1} parent=23 // pred_fallthru
          _
        %s118 = sand.u32 %s26, 1
        %s119 = scalar_lea.sflag [#allocation3], %s118
        %s120 = sand.u32 %s26, 1
        %s121 = smul.addr %s120, 8
        %s122 = scalar_lea.vmem [#allocation2], %s121
        %p123 = pneg %p39
        %p124 = pneg %p36
        %p125 = pneg %p65
        %p126 = pneg %p62
        %s127 = sand.u32 %s52, 1
        %s128 = scalar_lea.sflag [#allocation4], %s127
        %s129 = sand.u32 %s52, 1
        %s130 = smul.addr %s129, 8
        %s131 = scalar_lea.vmem [#allocation5], %s130
        %v132 = vld [vmem:[%s113] sm:$0xff]
        %vm133 = vcmask 261120
        %v134 = vsel %vm133, %v132, 0.0
        %135 = vadd.xlane.f32.xlu0 %v134
        %v136 = vpop.xlane.xlu0 %135
        %v137 = vrcp.pop 32.0
        %v138 = vmul.f32 %v136, %v137
        %v139 = vsub.f32 %v132, %v138
        %v140 = vmul.f32 %v139, %v139
        %v141 = vsel %vm133, %v140, 0.0
        %142 = vadd.xlane.f32.xlu0 %v141
        %v143 = vpop.xlane.xlu0 %142
        %v144 = vrsqrt.pop %v143
        %v145 = vmul.f32 %v143, %v144
        %vm146 = vcmp.eq.f32.partialorder %v143, inf
        %v147 = vsel %vm146, %v143, %v145
        %vm148 = vcmp.eq.f32.partialorder %v143, 0.0
        %v149 = vand.u32 %v143, 2147483648
        %v150 = vsel %vm148, %v149, %v147
        %v151 = vadd.f32 %v150, 1e-06
        %v152 = vrcp.pop %v151
        %v153 = vmul.f32 %v139, %v152
        %154 = vst.msk [vmem:[%s131] sm:$0xff] %vm133, %v153
        %s155 = sand.u32 %s52, 1
        %s156 = scalar_lea.sflag [#allocation4], %s155
        %s157 = sand.u32 %s52, 1
        %s158 = smul.addr %s157, 8
        %s159 = scalar_lea.vmem [#allocation5], %s158
        // Predicated region
        $region29: #{tpu_custom_call.1} parent=23 // pred_check
          %p160 = pneg %p62
        $region30: #{tpu_custom_call.1} parent=23 // pred_check_branch
          %162 = sbr.rel (%p160) target = $region32
        $region31: #{tpu_custom_call.1} parent=23 // pred_region
          %s164 = ssub.s32 128, 128
          %165 = vsyncadd %s156, %s164
          %s166 = smul.addr %s18, 128
          %s167 = scalar_lea.hbm %s1, %s166
          %s169 = sshll.u32 %s159, 4
          %s170 = int_to_ptr.vmem [resolvable:$true] %s169
          %172 = dma.vmem_to_hbm [thread:$0]  %s170, 128, %s167, %s156
        $region32: #{tpu_custom_call.1} parent=23 // pred_fallthru
          _
      $region24: #{tpu_custom_call.1} parent=5 // pred_fallthru
        _
      %p173 = scmp.le.s32.totalorder 2, %s13
      // Predicated region
      $region33: #{tpu_custom_call.1} parent=5 // pred_check
        %p174 = pneg %p173
      $region34: #{tpu_custom_call.1} parent=5 // pred_check_branch
        %176 = sbr.rel (%p174) target = $region36
      $region35: #{tpu_custom_call.1} parent=5 // pred_region
        %s177 = ssub.s32 %s13, 2
        // Predicated region
        $region37: #{tpu_custom_call.1} parent=35 // pred_check
          %p178 = pneg %p68
        $region38: #{tpu_custom_call.1} parent=35 // pred_check_branch
          %180 = sbr.rel (%p178) target = $region40
        $region39: #{tpu_custom_call.1} parent=35 // pred_region
          %s181 = sand.u32 %s53, 1
          %s182 = scalar_lea.sflag [#allocation4], %s181
          %s183 = sand.u32 %s53, 1
          %s184 = smul.addr %s183, 8
          %s185 = scalar_lea.vmem [#allocation5], %s184
          %186 = dma.done %s182, 128
        $region40: #{tpu_custom_call.1} parent=35 // pred_fallthru
          _
      $region36: #{tpu_custom_call.1} parent=5 // pred_fallthru
        _
    $region6: #{tpu_custom_call.1} parent=1 // loop_footer
      %s17 = sadd.s32 1, %s13
    $region7: #{tpu_custom_call.1} parent=1 // loop_footer_branch
      %12 = sbr.rel target = $region3
    $region8: #{tpu_custom_call.1} parent=1 // loop_exit
      _
    %187 = vsyncpa [#allocation3], 1
    %s188 = scalar_lea.sflag [#allocation3], 1
    %189 = vsyncpa %s188, 1
    %190 = vsyncpa [#allocation4], 1
    %s191 = scalar_lea.sflag [#allocation4], 1
    %192 = vsyncpa %s191, 1

</llo_original>
